<compile_context>
chip_gen: v6e
topology: v6e:2x2x1
jax: 0.10.0
libtpu: 0.0.40
codegen_flags: <defaults>
</compile_context>

<pallas_src>
import math

import jax
import jax.numpy as jnp
from jax.experimental import pallas as pl
from jax.experimental.pallas import tpu as pltpu


def _copy_kernel(x_ref, o_ref):
    # Pure copy of one lane-dense (block_rows, cols) tile.
    o_ref[...] = x_ref[...]


def _pick_cols(total, max_cols=8192):
    """Widest power-of-two multiple of 128 (<= max_cols) dividing `total`,
    or None if `total` is not a multiple of 128 (no lane-dense factoring)."""
    if total % 128 != 0:
        return None
    cols = 128
    while total % (cols * 2) == 0 and cols * 2 <= max_cols:
        cols *= 2
    return cols


def _pick_block_rows(rows, cols, itemsize, budget_bytes=4 << 20):
    """Dtype-aware, byte-budgeted block height.

    - sublane multiple: 8 (f32), 16 (bf16/f16), 32 (int8/fp8)
    - ~4 MiB per block => in+out double-buffered (~16 MiB) fits every chip's
      default scoped VMEM without raising vmem_limit_bytes.
    - If everything fits in one block, split into two so the "parallel" grid
      axis can shard across both v7x TensorCores.
    """
    min_sub = max(8, 32 // itemsize)
    if rows <= min_sub:
        return rows  # full-extent along rows: exempt from divisibility rules
    budget_rows = max(min_sub,
                      (budget_bytes // (cols * itemsize)) // min_sub * min_sub)
    if budget_rows >= rows:
        half = (((rows + 1) // 2) + min_sub - 1) // min_sub * min_sub
        return half if half < rows else rows
    return budget_rows


def _materializing_copy(x, out_shape):
    """Full-tensor copy via Pallas with lane-dense, VMEM-safe tiling."""
    total = math.prod(out_shape) if out_shape else 1
    itemsize = jnp.dtype(x.dtype).itemsize
    cols = _pick_cols(total)
    if total == 0 or cols is None:
        # No lane-dense factoring possible -> exact, free metadata reshape.
        return jnp.reshape(x, out_shape)

    rows = total // cols
    block_rows = _pick_block_rows(rows, cols, itemsize)
    grid = (pl.cdiv(rows, block_rows),)   # ragged last block handled by Pallas

    # Contiguous reshape (free) presenting a lane-dense 2D slab to Pallas.
    x2d = jnp.reshape(x, (rows, cols))

    out2d = pl.pallas_call(
        _copy_kernel,
        out_shape=jax.ShapeDtypeStruct((rows, cols), x.dtype),
        grid=grid,
        in_specs=[pl.BlockSpec((block_rows, cols), lambda i: (i, 0))],
        out_specs=pl.BlockSpec((block_rows, cols), lambda i: (i, 0)),
        input_output_aliases={0: 0},   # donate the input HBM buffer
        compiler_params=pltpu.CompilerParams(
            dimension_semantics=("parallel",)),
    )(x2d)

    return jnp.reshape(out2d, out_shape)


def squeeze_freq_forward(x, materialize=False):
    """Equivalent of SqueezeFreq.forward: x.squeeze(-1).

    Default path is a metadata-only reshape (the perf-review recommendation).
    Set materialize=True to force a fresh buffer via the Pallas copy kernel.
    """
    if x.ndim == 0 or x.shape[-1] != 1:
        # torch.squeeze(-1) is a no-op when the last dim != 1.
        return x

    out_shape = x.shape[:-1]
    if not materialize:
        # Free: squeezing a trailing size-1 axis is a pure metadata change.
        return jnp.reshape(x, out_shape)
    return _materializing_copy(x, out_shape)


if __name__ == "__main__":
    # SqueezeFreq is typically applied after the frequency axis has been
    # reduced to 1: x has shape (B, C, T, F=1) -> output (B, C, T).
    B, C, T, F = 2, 4, 16, 1
    key = jax.random.PRNGKey(0)
    x = jax.random.normal(key, (B, C, T, F), jnp.float32)
    ref = x[..., 0]

    # 1) Default (recommended) path: metadata-only reshape.
    y_fast = jax.block_until_ready(squeeze_freq_forward(x))
    assert y_fast.shape == (B, C, T), y_fast.shape
    assert jnp.array_equal(y_fast, ref)

    # 2) Materializing Pallas copy kernel (run once on TPU).
    y_kernel = jax.block_until_ready(squeeze_freq_forward(x, materialize=True))
    assert y_kernel.shape == (B, C, T), y_kernel.shape
    assert jnp.array_equal(y_kernel, ref)

    # 3) No-op path (last dim != 1) must return the input unchanged.
    z = jax.block_until_ready(squeeze_freq_forward(ref))   # T != 1
    assert z.shape == (B, C, T) and jnp.array_equal(z, ref)

    # 4) Awkward element count (not a multiple of 128) -> exact reshape fallback.
    w = jax.random.normal(key, (2, 3, 5, 1), jnp.float32)
    yw = jax.block_until_ready(squeeze_freq_forward(w, materialize=True))
    assert yw.shape == (2, 3, 5) and jnp.array_equal(yw, w[..., 0])

    print("KERNEL_OK")
</pallas_src>

<mosaic_0001>
module attributes {stable_mosaic.version = 11 : i64} {
  func.func @_copy_kernel(%arg0: i32, %arg1: memref<1x128xf32, #tpu.memory_space<vmem>>, %arg2: memref<1x128xf32, #tpu.memory_space<vmem>>) attributes {dimension_semantics = [#tpu.dimension_semantics<parallel>], iteration_bounds = array<i64: 1>, scalar_prefetch = 0 : i64, scratch_operands = 0 : i64, tpu.core_type = #tpu.core_type<tc>, window_params = [{transform_indices = @transform_0, window_bounds = array<i64: 1, 128>}, {transform_indices = @transform_1, window_bounds = array<i64: 1, 128>}]} {
    %c0 = arith.constant 0 : index
    %c0_0 = arith.constant 0 : index
    %0 = vector.load %arg1[%c0, %c0_0] : memref<1x128xf32, #tpu.memory_space<vmem>>, vector<1x128xf32>
    %c0_1 = arith.constant 0 : index
    %c0_2 = arith.constant 0 : index
    %1 = vector.load %arg2[%c0_1, %c0_2] : memref<1x128xf32, #tpu.memory_space<vmem>>, vector<1x128xf32>
    tpu.vector_store %arg2[%c0_1, %c0_2], %0 {strides = array<i32>} : memref<1x128xf32, #tpu.memory_space<vmem>>, vector<1x128xf32>,
    return
  }
  func.func @transform_0(%arg0: i32) -> (i32, i32) {
    %c0_i32 = arith.constant 0 : i32
    %c0_i32_0 = arith.constant 0 : i32
    return %arg0, %c0_i32 : i32, i32
  }
  func.func @transform_1(%arg0: i32) -> (i32, i32) {
    %c0_i32 = arith.constant 0 : i32
    %c0_i32_0 = arith.constant 0 : i32
    return %arg0, %c0_i32 : i32, i32
  }
}

</mosaic_0001>

<llo_original>
// kernel: tpu_custom_call.1
$region0: #{tpu_custom_call.1}
  #allocation0 [shape = 'u32[]', space=smem, size = 0x4, offset = 0x4, fixed_abs, tag = 'smem constant byte address 0x4 - core index']
  #allocation1 [shape = 'u32[144,128]{1,0:T(1,128)}', space=vmem, size = 0x12000, scoped, tag = 'internal scratch']
  %s0 = inlined_call_operand.hbm [shape: f32[1,128], index: 0, kind: input, shape index: {}, may-alias: {0,1}]
  %s1 = inlined_call_operand.hbm [shape: f32[1,128], index: 1, kind: output, shape index: {}, may-alias: {0,1}]
  %s2 = sld [smem:[#allocation0]]
  $region18: #{tpu_custom_call.1} parent=0
    _
  %s4 = ssub.s32 1, %s2
  %s5 = scalar_select 0, %s4, %s2
  $region1: #{tpu_custom_call.1} parent=0
    #allocation2 [shape = 'u8[512]{0}', space=vmem, size = 0x400, scoped, tag = 'input window, operand 0, single buffered']
    #allocation3 [shape = 's32[1]{0}', space=sflag, size = 0x4, scoped, tag = 'scoped memory for tpu_custom_call.1']
    #allocation4 [shape = 's32[1]{0}', space=sflag, size = 0x4, scoped, tag = 'scoped memory for tpu_custom_call.1']
    #allocation5 [shape = 'u8[512]{0}', space=vmem, size = 0x400, scoped, tag = 'output window, operand 0, single buffered']
    %6 = vsyncpa [#allocation3], 0
    %7 = vsyncpa [#allocation4], 0
    // Predicated region
    $region2: #{tpu_custom_call.1} parent=1 // pred_check
      _
    $region3: #{tpu_custom_call.1} parent=1 // pred_check_branch
      %9 = sbr.rel (0) target = $region5
    $region4: #{tpu_custom_call.1} parent=1 // pred_region
      %s11 = ssub.s32 16, 16
      %12 = vsyncadd [#allocation3], %s11
      %s14 = sshll.u32 [#allocation2], 4
      %s15 = int_to_ptr.vmem [resolvable:$true] %s14
      %17 = dma.hbm_to_vmem [thread:$0]  %s0, 16, %s15, [#allocation3]
    $region5: #{tpu_custom_call.1} parent=1 // pred_fallthru
      _
    // Predicated region
    $region6: #{tpu_custom_call.1} parent=1 // pred_check
      _
    $region7: #{tpu_custom_call.1} parent=1 // pred_check_branch
      %19 = sbr.rel (0) target = $region9
    $region8: #{tpu_custom_call.1} parent=1 // pred_region
      %20 = dma.done [#allocation3], 16
    $region9: #{tpu_custom_call.1} parent=1 // pred_fallthru
      _
    %v21 = vld [vmem:[#allocation2] sm:$0x1]
    %22 = vst [vmem:[#allocation5] sm:$0x1] %v21
    // Predicated region
    $region10: #{tpu_custom_call.1} parent=1 // pred_check
      _
    $region11: #{tpu_custom_call.1} parent=1 // pred_check_branch
      %24 = sbr.rel (0) target = $region13
    $region12: #{tpu_custom_call.1} parent=1 // pred_region
      %s26 = ssub.s32 16, 16
      %27 = vsyncadd [#allocation4], %s26
      %s29 = sshll.u32 [#allocation5], 4
      %s30 = int_to_ptr.vmem [resolvable:$true] %s29
      %32 = dma.vmem_to_hbm [thread:$0]  %s30, 16, %s1, [#allocation4]
    $region13: #{tpu_custom_call.1} parent=1 // pred_fallthru
      _
    // Predicated region
    $region14: #{tpu_custom_call.1} parent=1 // pred_check
      _
    $region15: #{tpu_custom_call.1} parent=1 // pred_check_branch
      %34 = sbr.rel (0) target = $region17
    $region16: #{tpu_custom_call.1} parent=1 // pred_region
      %35 = dma.done [#allocation4], 16
    $region17: #{tpu_custom_call.1} parent=1 // pred_fallthru
      _
    %36 = vsyncpa [#allocation3], 1
    %37 = vsyncpa [#allocation4], 1

</llo_original>
